<compile_context>
chip_gen: v7x
topology: tpu7x:2x2x1
jax: 0.10.0
libtpu: 0.0.40
codegen_flags: <defaults>
</compile_context>

<pallas_src>
import functools

import jax
import jax.numpy as jnp
from jax.experimental import pallas as pl
from jax.experimental.pallas import tpu as pltpu


def _round_up(a, b):
    return ((a + b - 1) // b) * b


def _vmem_capacity_bytes():
    """Physical per-core VMEM; conservative 64 MiB (v7x) fallback if the query fails."""
    try:
        return int(pltpu.get_tpu_info().vmem_capacity_bytes)
    except Exception:
        return 64 * 1024 * 1024


_MIB = 1024 * 1024
_VMEM_CAP = _vmem_capacity_bytes()
# Scoped VMEM we ask Mosaic for: capacity minus headroom, capped so v5e/v6e don't go silly.
_VMEM_LIMIT = max(32 * _MIB, min(_VMEM_CAP - 16 * _MIB, 112 * _MIB))
_SLACK = 4 * _MIB  # Mosaic internal scratch / misc headroom inside the scoped limit


def _const_spec(block_shape, index_map):
    """BlockSpec for an operand whose block index never changes across the grid: request a
    single VMEM buffer instead of the default double buffer (guarded for older jax)."""
    try:
        return pl.BlockSpec(block_shape, index_map, pipeline_mode=pl.Buffered(1))
    except Exception:  # pipeline_mode / Buffered unavailable -> default double buffering
        return pl.BlockSpec(block_shape, index_map)


def _plan_tiles(M, K, Cp, in_itemsize, tile_m=None):
    """Pick (tile1, tile2, n_shards, steps_per_shard, m_pad).

    tile2 (apply pass) streams bf16 input + f32 output, both double-buffered; tile1 (stats
    pass) only streams the input, so it can be several times larger.  tile1 is a multiple of
    tile2 so both passes share one zero-padded x12 of m_pad rows."""
    m8 = _round_up(max(M, 1), 8)
    w_bytes = K * Cp * in_itemsize                      # single-buffered weight

    # ---- pass 2 (apply): x12 in + f32 out, double-buffered streams ----
    fixed2 = w_bytes + 2 * Cp * 4 * 2 + _SLACK          # weight + scale/shift + slack
    per_row2 = 2 * K * in_itemsize + 2 * Cp * 4
    budget2 = max(_VMEM_LIMIT - fixed2, per_row2 * 8)
    t2 = min(budget2 // per_row2, 1024, m8)
    t2 = max(8, (t2 // 8) * 8)
    if tile_m is not None:
        t2 = max(8, (min(int(tile_m), m8) // 8) * 8)

    # ---- pass 1 (stats): only the x12 stream + (8, Cp) scratch + tiny partial outputs ----
    fixed1 = w_bytes + 2 * 8 * Cp * 4 + 4 * Cp * 4 + _SLACK
    per_row1 = 2 * K * in_itemsize
    budget1 = max(_VMEM_LIMIT - fixed1, per_row1 * 8)
    t1 = min(budget1 // per_row1, 4096, _round_up(m8, t2))
    t1 = max(t2, (t1 // t2) * t2)                       # multiple of t2

    steps1 = -(-M // t1)
    # Leading 'parallel' shard axis lets megacore parts split the stats reduction; on
    # single-TensorCore chips the extra shard just adds one tiny partial-sum combine.
    n_shards = 2 if steps1 >= 2 else 1
    steps_per_shard = -(-steps1 // n_shards)
    m_pad = n_shards * steps_per_shard * t1             # multiple of t1 (hence of t2)
    return t1, t2, n_shards, steps_per_shard, m_pad


def _stats_kernel(x_ref, w_ref, sum_ref, sq_ref, sum8_ref, sq8_ref):
    """block-diagonal matmul -> per-channel sum / sum-of-squares (relu already applied).

    Partial sums live in an (8, Cp) VMEM scratch (pure vreg adds); the single cross-sublane
    reduction happens once, on the last grid step of this shard."""
    i = pl.program_id(1)

    @pl.when(i == 0)
    def _():
        sum8_ref[...] = jnp.zeros_like(sum8_ref)
        sq8_ref[...] = jnp.zeros_like(sq8_ref)

    y = jnp.dot(x_ref[...], w_ref[...], preferred_element_type=jnp.float32)
    yp = y.reshape(-1, 8, y.shape[-1])            # (tile//8, 8, Cp): layout-preserving
    sum8_ref[...] += jnp.sum(yp, axis=0)
    sq8_ref[...] += jnp.sum(yp * yp, axis=0)

    @pl.when(i == pl.num_programs(1) - 1)
    def _():
        sum_ref[0] = jnp.sum(sum8_ref[...], axis=0, keepdims=True)
        sq_ref[0] = jnp.sum(sq8_ref[...], axis=0, keepdims=True)


def _apply_kernel(x_ref, w_ref, scale_ref, shift_ref, o_ref):
    """block-diagonal matmul -> folded BatchNorm (y * scale + shift), lane-dense f32 store."""
    y = jnp.dot(x_ref[...], w_ref[...], preferred_element_type=jnp.float32)
    o_ref[...] = y * scale_ref[...] + shift_ref[...]


@functools.partial(jax.jit, static_argnames=("eps", "tile_m", "use_bf16"))
def factorized_reduce(x, w1, w2, gamma, beta, eps=1e-5, tile_m=None, use_bf16=True):
    """x: (N, C_in, H, W) NCHW f32.  w1, w2: (C_out//2, C_in, 1, 1).  gamma, beta: (C_out,).
    Returns (N, C_out, H//2, W//2) NCHW f32, matching the PyTorch module in training mode."""
    N, C_in, H, W = x.shape
    assert H % 2 == 0 and W % 2 == 0, "even spatial dims required (as in the torch concat)"
    C_half = w1.shape[0]
    C_out = 2 * C_half
    Ho, Wo = H // 2, W // 2
    M = N * Ho * Wo
    K = 2 * C_in
    Cp = _round_up(C_out, 128)                    # lane-dense output width
    in_dtype = jnp.bfloat16 if use_bf16 else jnp.float32
    in_itemsize = 2 if use_bf16 else 4

    tile1, tile2, n_shards, steps_per_shard, m_pad = _plan_tiles(M, K, Cp, in_itemsize, tile_m)

    # ---- XLA-side glue (single fused chain): relu (f32) + parity gather + channel concat,
    #      cast to the stream dtype BEFORE the layout copy, flatten to rows, pad once. ----
    xg = jnp.concatenate(
        [jnp.maximum(x[:, :, ::2, ::2], 0.0),
         jnp.maximum(x[:, :, 1::2, 1::2], 0.0)],
        axis=1,
    ).astype(in_dtype)                            # (N, 2*C_in, Ho, Wo)
    x12 = jnp.transpose(xg, (0, 2, 3, 1)).reshape(M, K)
    if m_pad > M:                                 # zero rows contribute 0 to the statistics
        x12 = jnp.pad(x12, ((0, m_pad - M), (0, 0)))

    # Block-diagonal weight: y[:, :C_half] = x1 @ W1^T, y[:, C_half:C_out] = x2 @ W2^T.
    w1m = jnp.transpose(w1.reshape(C_half, C_in)).astype(jnp.float32)   # (C_in, C_half)
    w2m = jnp.transpose(w2.reshape(C_half, C_in)).astype(jnp.float32)
    w_bd = jnp.zeros((K, Cp), jnp.float32)
    w_bd = w_bd.at[:C_in, :C_half].set(w1m)
    w_bd = w_bd.at[C_in:, C_half:C_out].set(w2m)
    w_bd = w_bd.astype(in_dtype)

    # ---- pass 1: matmul + BN statistics (per-shard partial sums, f32 accumulation) ----
    ssum, ssq = pl.pallas_call(
        _stats_kernel,
        out_shape=(
            jax.ShapeDtypeStruct((n_shards, 1, Cp), jnp.float32),
            jax.ShapeDtypeStruct((n_shards, 1, Cp), jnp.float32),
        ),
        grid_spec=pltpu.PrefetchScalarGridSpec(
            num_scalar_prefetch=0,
            grid=(n_shards, steps_per_shard),
            in_specs=[
                pl.BlockSpec((tile1, K), lambda s, i: (s * steps_per_shard + i, 0)),
                _const_spec((K, Cp), lambda s, i: (0, 0)),
            ],
            out_specs=[
                pl.BlockSpec((1, 1, Cp), lambda s, i: (s, 0, 0)),
                pl.BlockSpec((1, 1, Cp), lambda s, i: (s, 0, 0)),
            ],
            scratch_shapes=[
                pltpu.VMEM((8, Cp), jnp.float32),
                pltpu.VMEM((8, Cp), jnp.float32),
            ],
        ),
        compiler_params=pltpu.CompilerParams(
            dimension_semantics=("parallel", "arbitrary"),
            vmem_limit_bytes=_VMEM_LIMIT,
        ),
    )(x12, w_bd)

    # ---- tiny O(C_out) finalize: fold training-mode BatchNorm into scale/shift ----
    total = jnp.sum(ssum, axis=(0, 1))            # (Cp,)
    total_sq = jnp.sum(ssq, axis=(0, 1))
    mean = total / M                              # divide by the TRUE row count
    # E[y^2] - E[y]^2 in f32; clamp at 0 guards against cancellation for large means.
    var = jnp.maximum(total_sq / M - mean * mean, 0.0)
    g = jnp.zeros((Cp,), jnp.float32).at[:C_out].set(gamma.astype(jnp.float32))
    b = jnp.zeros((Cp,), jnp.float32).at[:C_out].set(beta.astype(jnp.float32))
    scale_v = g * jax.lax.rsqrt(var + eps)
    shift_v = b - mean * scale_v
    scale = scale_v.reshape(1, Cp)
    shift = shift_v.reshape(1, Cp)

    # ---- pass 2: recompute matmul, apply folded BN, write the flat output directly ----
    out_flat = pl.pallas_call(
        _apply_kernel,
        out_shape=jax.ShapeDtypeStruct((m_pad, Cp), jnp.float32),
        grid_spec=pltpu.PrefetchScalarGridSpec(
            num_scalar_prefetch=0,
            grid=(m_pad // tile2,),
            in_specs=[
                pl.BlockSpec((tile2, K), lambda i: (i, 0)),
                _const_spec((K, Cp), lambda i: (0, 0)),
                _const_spec((1, Cp), lambda i: (0, 0)),
                _const_spec((1, Cp), lambda i: (0, 0)),
            ],
            out_specs=pl.BlockSpec((tile2, Cp), lambda i: (i, 0)),
        ),
        compiler_params=pltpu.CompilerParams(
            dimension_semantics=("parallel",),
            vmem_limit_bytes=_VMEM_LIMIT,
        ),
    )(x12, w_bd, scale, shift)

    # TODO(synk): return NHWC (or write NCHW directly from the kernel) when the consumer
    #             allows it; this slice + transpose re-streams the whole output in XLA.
    out_nhwc = out_flat[:M, :C_out].reshape(N, Ho, Wo, C_out)
    return jnp.transpose(out_nhwc, (0, 3, 1, 2))


def _reference(x, w1, w2, gamma, beta, eps=1e-5):
    """Pure-JAX f32 reference matching the PyTorch forward (training-mode BatchNorm)."""
    C_half = w1.shape[0]
    xr = jnp.maximum(x, 0.0)
    w1m = w1.reshape(C_half, -1)
    w2m = w2.reshape(C_half, -1)
    y1 = jnp.einsum("nchw,oc->nohw", xr[:, :, ::2, ::2], w1m)
    y2 = jnp.einsum("nchw,oc->nohw", xr[:, :, 1::2, 1::2], w2m)
    y = jnp.concatenate([y1, y2], axis=1)
    mean = jnp.mean(y, axis=(0, 2, 3), keepdims=True)
    var = jnp.var(y, axis=(0, 2, 3), keepdims=True)
    g = gamma.reshape(1, -1, 1, 1)
    b = beta.reshape(1, -1, 1, 1)
    return (y - mean) * jax.lax.rsqrt(var + eps) * g + b


if __name__ == "__main__":
    N, C_in, C_out, H, W = 2, 4, 8, 16, 16
    key = jax.random.PRNGKey(0)
    kx, k1, k2, kg, kb = jax.random.split(key, 5)

    x = jax.random.normal(kx, (N, C_in, H, W), dtype=jnp.float32)
    # Conv2d(C_in, C_out//2, 1, stride=2, bias=False) weights: (C_out//2, C_in, 1, 1)
    w1 = jax.random.normal(k1, (C_out // 2, C_in, 1, 1), dtype=jnp.float32) * 0.5
    w2 = jax.random.normal(k2, (C_out // 2, C_in, 1, 1), dtype=jnp.float32) * 0.5
    # BatchNorm2d(C_out, affine=True) parameters
    gamma = 1.0 + 0.1 * jax.random.normal(kg, (C_out,), dtype=jnp.float32)
    beta = 0.1 * jax.random.normal(kb, (C_out,), dtype=jnp.float32)

    out = factorized_reduce(x, w1, w2, gamma, beta)
    out = jax.block_until_ready(out)

    ref = _reference(x, w1, w2, gamma, beta)
    assert out.shape == (N, C_out, H // 2, W // 2), out.shape
    err = float(jnp.max(jnp.abs(out - ref)))
    # bf16 activation/weight streams (f32 accumulation): loosened tolerance vs f32 reference.
    assert jnp.allclose(out, ref, atol=5e-2, rtol=5e-2), err

    print("KERNEL_OK")
</pallas_src>

<mosaic_0001>
module attributes {stable_mosaic.version = 11 : i64} {
  func.func @_stats_kernel(%arg0: i32, %arg1: i32, %arg2: memref<128x8xbf16, #tpu.memory_space<vmem>>, %arg3: memref<8x128xbf16, #tpu.memory_space<vmem>>, %arg4: memref<1x1x128xf32, #tpu.memory_space<vmem>>, %arg5: memref<1x1x128xf32, #tpu.memory_space<vmem>>, %arg6: memref<8x128xf32, #tpu.memory_space<vmem>>, %arg7: memref<8x128xf32, #tpu.memory_space<vmem>>) attributes {dimension_semantics = [#tpu.dimension_semantics<parallel>, #tpu.dimension_semantics<arbitrary>], iteration_bounds = array<i64: 1, 1>, scalar_prefetch = 0 : i64, scratch_operands = 2 : i64, tpu.core_type = #tpu.core_type<tc>, window_params = [{transform_indices = @transform_0, window_bounds = array<i64: 128, 8>}, {pipeline_mode = #tpu.pipeline_mode<synchronous>, transform_indices = @transform_1, window_bounds = array<i64: 8, 128>}, {transform_indices = @transform_2, window_bounds = array<i64: 1, 1, 128>}, {transform_indices = @transform_3, window_bounds = array<i64: 1, 1, 128>}]} {
    %c0_i32 = arith.constant 0 : i32
    %0 = arith.cmpi eq, %arg1, %c0_i32 : i32
    %1 = arith.extui %0 : i1 to i32
    %c0_i32_0 = arith.constant 0 : i32
    %2 = arith.cmpi ne, %1, %c0_i32_0 : i32
    scf.if %2 {
      %cst_16 = arith.constant 0.000000e+00 : f32
      %19 = vector.broadcast %cst_16 : f32 to vector<8x128xf32>
      %c0_17 = arith.constant 0 : index
      %c0_18 = arith.constant 0 : index
      %20 = vector.load %arg6[%c0_17, %c0_18] : memref<8x128xf32, #tpu.memory_space<vmem>>, vector<8x128xf32>
      tpu.vector_store %arg6[%c0_17, %c0_18], %19 {strides = array<i32>} : memref<8x128xf32, #tpu.memory_space<vmem>>, vector<8x128xf32>,
      %cst_19 = arith.constant 0.000000e+00 : f32
      %21 = vector.broadcast %cst_19 : f32 to vector<8x128xf32>
      %c0_20 = arith.constant 0 : index
      %c0_21 = arith.constant 0 : index
      %22 = vector.load %arg7[%c0_20, %c0_21] : memref<8x128xf32, #tpu.memory_space<vmem>>, vector<8x128xf32>
      tpu.vector_store %arg7[%c0_20, %c0_21], %21 {strides = array<i32>} : memref<8x128xf32, #tpu.memory_space<vmem>>, vector<8x128xf32>,
    } else {
    }
    %c0 = arith.constant 0 : index
    %c0_1 = arith.constant 0 : index
    %3 = vector.load %arg2[%c0, %c0_1] : memref<128x8xbf16, #tpu.memory_space<vmem>>, vector<128x8xbf16>
    %c0_2 = arith.constant 0 : index
    %c0_3 = arith.constant 0 : index
    %4 = vector.load %arg3[%c0_2, %c0_3] : memref<8x128xbf16, #tpu.memory_space<vmem>>, vector<8x128xbf16>
    %cst = arith.constant dense<0.000000e+00> : vector<128x128xf32>
    %5 = tpu.matmul %3, %4, %cst {dimension_numbers = #tpu.dot_dimension_numbers<[1], [0], [0], [1], [0, 0, 1, 1], [], []>} : vector<128x8xbf16>, vector<8x128xbf16>, vector<128x128xf32> -> vector<128x128xf32>
    %6 = vector.shape_cast %5 : vector<128x128xf32> to vector<16x8x128xf32>
    %c0_4 = arith.constant 0 : index
    %c0_5 = arith.constant 0 : index
    %7 = vector.load %arg6[%c0_4, %c0_5] : memref<8x128xf32, #tpu.memory_space<vmem>>, vector<8x128xf32>
    %cst_6 = arith.constant dense<0.000000e+00> : vector<8x128xf32>
    %8 = vector.multi_reduction <add>, %6, %cst_6 [0] : vector<16x8x128xf32> to vector<8x128xf32>
    %9 = arith.addf %7, %8 : vector<8x128xf32>
    %c0_7 = arith.constant 0 : index
    %c0_8 = arith.constant 0 : index
    %10 = vector.load %arg6[%c0_7, %c0_8] : memref<8x128xf32, #tpu.memory_space<vmem>>, vector<8x128xf32>
    tpu.vector_store %arg6[%c0_7, %c0_8], %9 {strides = array<i32>} : memref<8x128xf32, #tpu.memory_space<vmem>>, vector<8x128xf32>,
    %c0_9 = arith.constant 0 : index
    %c0_10 = arith.constant 0 : index
    %11 = vector.load %arg7[%c0_9, %c0_10] : memref<8x128xf32, #tpu.memory_space<vmem>>, vector<8x128xf32>
    %12 = arith.mulf %6, %6 : vector<16x8x128xf32>
    %cst_11 = arith.constant dense<0.000000e+00> : vector<8x128xf32>
    %13 = vector.multi_reduction <add>, %12, %cst_11 [0] : vector<16x8x128xf32> to vector<8x128xf32>
    %14 = arith.addf %11, %13 : vector<8x128xf32>
    %c0_12 = arith.constant 0 : index
    %c0_13 = arith.constant 0 : index
    %15 = vector.load %arg7[%c0_12, %c0_13] : memref<8x128xf32, #tpu.memory_space<vmem>>, vector<8x128xf32>
    tpu.vector_store %arg7[%c0_12, %c0_13], %14 {strides = array<i32>} : memref<8x128xf32, #tpu.memory_space<vmem>>, vector<8x128xf32>,
    %c0_i32_14 = arith.constant 0 : i32
    %16 = arith.cmpi eq, %arg1, %c0_i32_14 : i32
    %17 = arith.extui %16 : i1 to i32
    %c0_i32_15 = arith.constant 0 : i32
    %18 = arith.cmpi ne, %17, %c0_i32_15 : i32
    scf.if %18 {
      %c0_16 = arith.constant 0 : index
      %c0_17 = arith.constant 0 : index
      %19 = vector.load %arg6[%c0_16, %c0_17] : memref<8x128xf32, #tpu.memory_space<vmem>>, vector<8x128xf32>
      %cst_18 = arith.constant dense<0.000000e+00> : vector<128xf32>
      %20 = vector.multi_reduction <add>, %19, %cst_18 [0] : vector<8x128xf32> to vector<128xf32>
      %21 = vector.shape_cast %20 : vector<128xf32> to vector<1x128xf32>
      %c0_19 = arith.constant 0 : index
      %c0_20 = arith.constant 0 : index
      %c0_21 = arith.constant 0 : index
      %22 = vector.load %arg4[%c0_19, %c0_20, %c0_21] : memref<1x1x128xf32, #tpu.memory_space<vmem>>, vector<1x1x128xf32>
      %23 = vector.shape_cast %22 : vector<1x1x128xf32> to vector<1x128xf32>
      %24 = vector.shape_cast %21 : vector<1x128xf32> to vector<1x1x128xf32>
      tpu.vector_store %arg4[%c0_19, %c0_20, %c0_21], %24 {strides = array<i32>} : memref<1x1x128xf32, #tpu.memory_space<vmem>>, vector<1x1x128xf32>,
      %c0_22 = arith.constant 0 : index
      %c0_23 = arith.constant 0 : index
      %25 = vector.load %arg7[%c0_22, %c0_23] : memref<8x128xf32, #tpu.memory_space<vmem>>, vector<8x128xf32>
      %cst_24 = arith.constant dense<0.000000e+00> : vector<128xf32>
      %26 = vector.multi_reduction <add>, %25, %cst_24 [0] : vector<8x128xf32> to vector<128xf32>
      %27 = vector.shape_cast %26 : vector<128xf32> to vector<1x128xf32>
      %c0_25 = arith.constant 0 : index
      %c0_26 = arith.constant 0 : index
      %c0_27 = arith.constant 0 : index
      %28 = vector.load %arg5[%c0_25, %c0_26, %c0_27] : memref<1x1x128xf32, #tpu.memory_space<vmem>>, vector<1x1x128xf32>
      %29 = vector.shape_cast %28 : vector<1x1x128xf32> to vector<1x128xf32>
      %30 = vector.shape_cast %27 : vector<1x128xf32> to vector<1x1x128xf32>
      tpu.vector_store %arg5[%c0_25, %c0_26, %c0_27], %30 {strides = array<i32>} : memref<1x1x128xf32, #tpu.memory_space<vmem>>, vector<1x1x128xf32>,
    } else {
    }
    return
  }
  func.func @transform_0(%arg0: i32, %arg1: i32) -> (i32, i32) {
    %c1_i32 = arith.constant 1 : i32
    %0 = arith.muli %arg0, %c1_i32 : i32
    %1 = arith.addi %0, %arg1 : i32
    %c0_i32 = arith.constant 0 : i32
    %c0_i32_0 = arith.constant 0 : i32
    return %1, %c0_i32 : i32, i32
  }
  func.func @transform_1(%arg0: i32, %arg1: i32) -> (i32, i32) {
    %c0_i32 = arith.constant 0 : i32
    %c0_i32_0 = arith.constant 0 : i32
    %c0_i32_1 = arith.constant 0 : i32
    return %c0_i32, %c0_i32_0 : i32, i32
  }
  func.func @transform_2(%arg0: i32, %arg1: i32) -> (i32, i32, i32) {
    %c0_i32 = arith.constant 0 : i32
    %c0_i32_0 = arith.constant 0 : i32
    %c0_i32_1 = arith.constant 0 : i32
    return %arg0, %c0_i32, %c0_i32_0 : i32, i32, i32
  }
  func.func @transform_3(%arg0: i32, %arg1: i32) -> (i32, i32, i32) {
    %c0_i32 = arith.constant 0 : i32
    %c0_i32_0 = arith.constant 0 : i32
    %c0_i32_1 = arith.constant 0 : i32
    return %arg0, %c0_i32, %c0_i32_0 : i32, i32, i32
  }
}

module attributes {stable_mosaic.version = 11 : i64} {
  func.func @_apply_kernel(%arg0: i32, %arg1: memref<128x8xbf16, #tpu.memory_space<vmem>>, %arg2: memref<8x128xbf16, #tpu.memory_space<vmem>>, %arg3: memref<1x128xf32, #tpu.memory_space<vmem>>, %arg4: memref<1x128xf32, #tpu.memory_space<vmem>>, %arg5: memref<128x128xf32, #tpu.memory_space<vmem>>) attributes {dimension_semantics = [#tpu.dimension_semantics<parallel>], iteration_bounds = array<i64: 1>, scalar_prefetch = 0 : i64, scratch_operands = 0 : i64, tpu.core_type = #tpu.core_type<tc>, window_params = [{transform_indices = @transform_0, window_bounds = array<i64: 128, 8>}, {pipeline_mode = #tpu.pipeline_mode<synchronous>, transform_indices = @transform_1, window_bounds = array<i64: 8, 128>}, {pipeline_mode = #tpu.pipeline_mode<synchronous>, transform_indices = @transform_2, window_bounds = array<i64: 1, 128>}, {pipeline_mode = #tpu.pipeline_mode<synchronous>, transform_indices = @transform_3, window_bounds = array<i64: 1, 128>}, {transform_indices = @transform_4, window_bounds = array<i64: 128, 128>}]} {
    %c0 = arith.constant 0 : index
    %c0_0 = arith.constant 0 : index
    %0 = vector.load %arg1[%c0, %c0_0] : memref<128x8xbf16, #tpu.memory_space<vmem>>, vector<128x8xbf16>
    %c0_1 = arith.constant 0 : index
    %c0_2 = arith.constant 0 : index
    %1 = vector.load %arg2[%c0_1, %c0_2] : memref<8x128xbf16, #tpu.memory_space<vmem>>, vector<8x128xbf16>
    %cst = arith.constant dense<0.000000e+00> : vector<128x128xf32>
    %2 = tpu.matmul %0, %1, %cst {dimension_numbers = #tpu.dot_dimension_numbers<[1], [0], [0], [1], [0, 0, 1, 1], [], []>} : vector<128x8xbf16>, vector<8x128xbf16>, vector<128x128xf32> -> vector<128x128xf32>
    %c0_3 = arith.constant 0 : index
    %c0_4 = arith.constant 0 : index
    %3 = vector.load %arg3[%c0_3, %c0_4] : memref<1x128xf32, #tpu.memory_space<vmem>>, vector<1x128xf32>
    %4 = vector.broadcast %3 : vector<1x128xf32> to vector<128x128xf32>
    %5 = arith.mulf %2, %4 : vector<128x128xf32>
    %c0_5 = arith.constant 0 : index
    %c0_6 = arith.constant 0 : index
    %6 = vector.load %arg4[%c0_5, %c0_6] : memref<1x128xf32, #tpu.memory_space<vmem>>, vector<1x128xf32>
    %7 = vector.broadcast %6 : vector<1x128xf32> to vector<128x128xf32>
    %8 = arith.addf %5, %7 : vector<128x128xf32>
    %c0_7 = arith.constant 0 : index
    %c0_8 = arith.constant 0 : index
    %9 = vector.load %arg5[%c0_7, %c0_8] : memref<128x128xf32, #tpu.memory_space<vmem>>, vector<128x128xf32>
    tpu.vector_store %arg5[%c0_7, %c0_8], %8 {strides = array<i32>} : memref<128x128xf32, #tpu.memory_space<vmem>>, vector<128x128xf32>,
    return
  }
  func.func @transform_0(%arg0: i32) -> (i32, i32) {
    %c0_i32 = arith.constant 0 : i32
    %c0_i32_0 = arith.constant 0 : i32
    return %arg0, %c0_i32 : i32, i32
  }
  func.func @transform_1(%arg0: i32) -> (i32, i32) {
    %c0_i32 = arith.constant 0 : i32
    %c0_i32_0 = arith.constant 0 : i32
    %c0_i32_1 = arith.constant 0 : i32
    return %c0_i32, %c0_i32_0 : i32, i32
  }
  func.func @transform_2(%arg0: i32) -> (i32, i32) {
    %c0_i32 = arith.constant 0 : i32
    %c0_i32_0 = arith.constant 0 : i32
    %c0_i32_1 = arith.constant 0 : i32
    return %c0_i32, %c0_i32_0 : i32, i32
  }
  func.func @transform_3(%arg0: i32) -> (i32, i32) {
    %c0_i32 = arith.constant 0 : i32
    %c0_i32_0 = arith.constant 0 : i32
    %c0_i32_1 = arith.constant 0 : i32
    return %c0_i32, %c0_i32_0 : i32, i32
  }
  func.func @transform_4(%arg0: i32) -> (i32, i32) {
    %c0_i32 = arith.constant 0 : i32
    %c0_i32_0 = arith.constant 0 : i32
    return %arg0, %c0_i32 : i32, i32
  }
}

</mosaic_0001>

<llo_original>
// kernel: factorized_reduce.2
$region0: #{factorized_reduce.2}
  #allocation0 [shape = 'u32[]', space=smem, size = 0x4, offset = 0x4, fixed_abs, tag = 'smem constant byte address 0x4 - core index']
  #allocation1 [shape = 'u32[144,128]{1,0:T(1,128)}', space=vmem, size = 0x12000, scoped, tag = 'internal scratch']
  #allocation2 [shape = 'f32[8,128]{1,0:T(8,128)}', space=vmem, size = 0x1000, scoped, tag = 'scratch operand']
  #allocation3 [shape = 'f32[8,128]{1,0:T(8,128)}', space=vmem, size = 0x1000, scoped, tag = 'scratch operand']
  %s0 = inlined_call_operand.vmem [shape: bf16[128,8], index: 0, kind: input, shape index: {}]
  %s1 = inlined_call_operand.vmem [shape: bf16[8,128], index: 1, kind: input, shape index: {}]
  %s2 = inlined_call_operand.vmem [shape: f32[1,1,128], index: 2, kind: output, shape index: {0}]
  %s3 = inlined_call_operand.vmem [shape: f32[1,1,128], index: 3, kind: output, shape index: {1}]
  %4 = xla_tuple %s2, %s3
  %s5 = sld [smem:[#allocation0]]
  $region34: #{factorized_reduce.2} parent=0
    _
  %s7 = ssub.s32 1, %s5
  %s8 = scalar_select 0, %s7, %s5
  // Predicated region
  $region2: #{factorized_reduce.2} parent=0 // pred_check
    _
  $region3: #{factorized_reduce.2} parent=0 // pred_check_branch
    %10 = sbr.rel (0) target = $region5
  $region4: #{factorized_reduce.2} parent=0 // pred_region
    %s11 = sadd.s32 0, 0
    %s12 = smul.u32 16, %s11
    %p13 = scmp.lt.s32.totalorder %s12, 15
    %s14 = scalar_select %p13, %s12, 15
    %s15 = smul.addr %s14, 4
    %s16 = scalar_lea.vmem %s0, %s15
    %s17 = sadd.s32 0, 0
    %s18 = smul.u32 16, %s17
  $region5: #{factorized_reduce.2} parent=0 // pred_fallthru
    _
  // Predicated region
  $region6: #{factorized_reduce.2} parent=0 // pred_check
    _
  $region7: #{factorized_reduce.2} parent=0 // pred_check_branch
    %20 = sbr.rel (0) target = $region9
  $region8: #{factorized_reduce.2} parent=0 // pred_region
    _
  $region9: #{factorized_reduce.2} parent=0 // pred_fallthru
    _
  %s21 = sadd.s32 0, 0
  %s22 = smul.u32 16, %s21
  %p23 = scmp.lt.s32.totalorder %s22, 15
  %s24 = scalar_select %p23, %s22, 15
  %s25 = smul.addr %s24, 4
  %s26 = scalar_lea.vmem %s0, %s25
  %s27 = sadd.s32 0, 0
  %s28 = smul.u32 16, %s27
  %p29 = scmp.lt.s32.totalorder %s28, 15
  %s30 = scalar_select %p29, %s28, 15
  %s31 = smul.addr %s30, 4
  %s32 = scalar_lea.vmem %s0, %s31
  %s33 = sadd.s32 0, 0
  %s34 = smul.u32 16, %s33
  %p36 = scmp.eq.s32.totalorder 0, 0
  // Predicated region
  $region10: #{factorized_reduce.2} parent=0 // pred_check
    %p37 = pneg %p36
  $region11: #{factorized_reduce.2} parent=0 // pred_check_branch
    %39 = sbr.rel (%p37) target = $region13
  $region12: #{factorized_reduce.2} parent=0 // pred_region
    %40 = vst [vmem:[#allocation2] sm:$0xff] 0.0
    %41 = vst [vmem:[#allocation3] sm:$0xff] 0.0
  $region13: #{factorized_reduce.2} parent=0 // pred_fallthru
    _
  %v42 = vld [vmem:[%s32] sm:$0xf]
  %v43 = vld [vmem:[%s32 + $0x4] sm:$0xf]
  %v44 = vld [vmem:[%s32 + $0x8] sm:$0xf]
  %v45 = vld [vmem:[%s32 + $0xc] sm:$0xf]
  %v46 = vld [vmem:[%s32 + $0x10] sm:$0xf]
  %v47 = vld [vmem:[%s32 + $0x14] sm:$0xf]
  %v48 = vld [vmem:[%s32 + $0x18] sm:$0xf]
  %v49 = vld [vmem:[%s32 + $0x1c] sm:$0xf]
  %v50 = vld [vmem:[%s32 + $0x20] sm:$0xf]
  %v51 = vld [vmem:[%s32 + $0x24] sm:$0xf]
  %v52 = vld [vmem:[%s32 + $0x28] sm:$0xf]
  %v53 = vld [vmem:[%s32 + $0x2c] sm:$0xf]
  %v54 = vld [vmem:[%s32 + $0x30] sm:$0xf]
  %v55 = vld [vmem:[%s32 + $0x34] sm:$0xf]
  %v56 = vld [vmem:[%s32 + $0x38] sm:$0xf]
  %v57 = vld [vmem:[%s32 + $0x3c] sm:$0xf]
  %v58 = vld [vmem:[%s1] sm:$0xf]
  %v75 = vunpack.c.l.b16 %v42
  %v76 = vunpack.c.l.b16 %v43
  %v77 = vunpack.c.l.b16 %v44
  %v78 = vunpack.c.l.b16 %v45
  %v79 = vunpack.c.l.b16 %v46
  %v80 = vunpack.c.l.b16 %v47
  %v81 = vunpack.c.l.b16 %v48
  %v82 = vunpack.c.l.b16 %v49
  %v83 = vunpack.c.l.b16 %v50
  %v84 = vunpack.c.l.b16 %v51
  %v85 = vunpack.c.l.b16 %v52
  %v86 = vunpack.c.l.b16 %v53
  %v87 = vunpack.c.l.b16 %v54
  %v88 = vunpack.c.l.b16 %v55
  %v89 = vunpack.c.l.b16 %v56
  %v90 = vunpack.c.l.b16 %v57
  %v91 = vpack.c.b16 %v76, %v75
  %v92 = vpack.c.b16 %v78, %v77
  %v93 = vpack.c.b16 %v80, %v79
  %v94 = vpack.c.b16 %v82, %v81
  %v95 = vpack.c.b16 %v84, %v83
  %v96 = vpack.c.b16 %v86, %v85
  %v97 = vpack.c.b16 %v88, %v87
  %v98 = vpack.c.b16 %v90, %v89
  %vm99 = vcmask 64512
  %v101 = vsel %vm99, %v91, 0
  %v104 = vsel %vm99, %v92, 0
  %v107 = vsel %vm99, %v93, 0
  %v110 = vsel %vm99, %v94, 0
  %v113 = vsel %vm99, %v95, 0
  %v116 = vsel %vm99, %v96, 0
  %v119 = vsel %vm99, %v97, 0
  %v122 = vsel %vm99, %v98, 0
  %vm124 = vcmask 1043456
  %v126 = vsel %vm124, %v58, 0
  %128 = vmatprep.subr.bf16.mxu0 0
  %129 = vmatpush1.bf16.msra.mxu0 %v126
  %130 = vmatprep.subr.bf16.mxu0 0
  %131 = vmatpush1.bf16.msra.mxu0 0
  %132 = vmatprep.subr.bf16.mxu0 0
  %133 = vmatpush1.bf16.msra.mxu0 0
  %134 = vmatprep.subr.bf16.mxu0 0
  %135 = vmatpush1.bf16.msra.mxu0 0
  %136 = vmatprep.subr.bf16.mxu0 0
  %137 = vmatpush1.bf16.msra.mxu0 0
  %138 = vmatprep.subr.bf16.mxu0 0
  %139 = vmatpush1.bf16.msra.mxu0 0
  %140 = vmatprep.subr.bf16.mxu0 0
  %141 = vmatpush1.bf16.msra.mxu0 0
  %142 = vmatprep.subr.bf16.mxu0 0
  %143 = vmatpush1.bf16.msra.mxu0 0
  %144 = vmatprep.subr.bf16.mxu0 0
  %145 = vmatpush1.bf16.msra.mxu0 0
  %146 = vmatprep.subr.bf16.mxu0 0
  %147 = vmatpush1.bf16.msra.mxu0 0
  %148 = vmatprep.subr.bf16.mxu0 0
  %149 = vmatpush1.bf16.msra.mxu0 0
  %150 = vmatprep.subr.bf16.mxu0 0
  %151 = vmatpush1.bf16.msra.mxu0 0
  %152 = vmatprep.subr.bf16.mxu0 0
  %153 = vmatpush1.bf16.msra.mxu0 0
  %154 = vmatprep.subr.bf16.mxu0 0
  %155 = vmatpush1.bf16.msra.mxu0 0
  %156 = vmatprep.subr.bf16.mxu0 0
  %157 = vmatpush1.bf16.msra.mxu0 0
  %158 = vmatprep.subr.bf16.mxu0 0
  %159 = vmatpush1.bf16.msra.mxu0 0
  %160 = vmatprep.mubr.bf16.mxu0 0
  %161 = vmatmul.mubr.bf16.gmra.mrb[0].mxu0 %v101
  %v162 = vpop.f32.mrb[0].mxu0
  %v163 = vadd.f32 0.0, %v162
  %v164 = vpop.f32.mrb[0].mxu0
  %v165 = vpop.f32.mrb[0].mxu0
  %v166 = vadd.f32 0.0, %v165
  %v167 = vpop.f32.mrb[0].mxu0
  %168 = vmatprep.mubr.bf16.mxu0 0
  %169 = vmatmul.mubr.bf16.gmra.mrb[0].mxu0 %v104
  %v170 = vpop.f32.mrb[0].mxu0
  %v171 = vadd.f32 0.0, %v170
  %v172 = vpop.f32.mrb[0].mxu0
  %v173 = vpop.f32.mrb[0].mxu0
  %v174 = vadd.f32 0.0, %v173
  %v175 = vpop.f32.mrb[0].mxu0
  %176 = vmatprep.mubr.bf16.mxu0 0
  %177 = vmatmul.mubr.bf16.gmra.mrb[0].mxu0 %v107
  %v178 = vpop.f32.mrb[0].mxu0
  %v179 = vadd.f32 0.0, %v178
  %v180 = vpop.f32.mrb[0].mxu0
  %v181 = vpop.f32.mrb[0].mxu0
  %v182 = vadd.f32 0.0, %v181
  %v183 = vpop.f32.mrb[0].mxu0
  %184 = vmatprep.mubr.bf16.mxu0 0
  %185 = vmatmul.mubr.bf16.gmra.mrb[0].mxu0 %v110
  %v186 = vpop.f32.mrb[0].mxu0
  %v187 = vadd.f32 0.0, %v186
  %v188 = vpop.f32.mrb[0].mxu0
  %v189 = vpop.f32.mrb[0].mxu0
  %v190 = vadd.f32 0.0, %v189
  %v191 = vpop.f32.mrb[0].mxu0
  %192 = vmatprep.mubr.bf16.mxu0 0
  %193 = vmatmul.mubr.bf16.gmra.mrb[0].mxu0 %v113
  %v194 = vpop.f32.mrb[0].mxu0
  %v195 = vadd.f32 0.0, %v194
  %v196 = vpop.f32.mrb[0].mxu0
  %v197 = vpop.f32.mrb[0].mxu0
  %v198 = vadd.f32 0.0, %v197
  %v199 = vpop.f32.mrb[0].mxu0
  %200 = vmatprep.mubr.bf16.mxu0 0
  %201 = vmatmul.mubr.bf16.gmra.mrb[0].mxu0 %v116
  %v202 = vpop.f32.mrb[0].mxu0
  %v203 = vadd.f32 0.0, %v202
  %v204 = vpop.f32.mrb[0].mxu0
  %v205 = vpop.f32.mrb[0].mxu0
  %v206 = vadd.f32 0.0, %v205
  %v207 = vpop.f32.mrb[0].mxu0
  %208 = vmatprep.mubr.bf16.mxu0 0
  %209 = vmatmul.mubr.bf16.gmra.mrb[0].mxu0 %v119
  %v210 = vpop.f32.mrb[0].mxu0
  %v211 = vadd.f32 0.0, %v210
  %v212 = vpop.f32.mrb[0].mxu0
  %v213 = vpop.f32.mrb[0].mxu0
  %v214 = vadd.f32 0.0, %v213
  %v215 = vpop.f32.mrb[0].mxu0
  %216 = vmatprep.mubr.bf16.mxu0 0
  %217 = vmatmul.mubr.bf16.gmra.mrb[0].mxu0 %v122
  %v218 = vpop.f32.mrb[0].mxu0
  %v219 = vadd.f32 0.0, %v218
  %v220 = vpop.f32.mrb[0].mxu0
  %v221 = vpop.f32.mrb[0].mxu0
  %v222 = vadd.f32 0.0, %v221
  %v223 = vpop.f32.mrb[0].mxu0
  %224 = vdwg.mxu0
  %v225 = vld [vmem:[#allocation2] sm:$0xff]
  %v226 = vadd.f32 %v163, %v166
  %v227 = vadd.f32 %v226, %v171
  %v228 = vadd.f32 %v227, %v174
  %v229 = vadd.f32 %v228, %v179
  %v230 = vadd.f32 %v229, %v182
  %v231 = vadd.f32 %v230, %v187
  %v232 = vadd.f32 %v231, %v190
  %v233 = vadd.f32 %v232, %v195
  %v234 = vadd.f32 %v233, %v198
  %v235 = vadd.f32 %v234, %v203
  %v236 = vadd.f32 %v235, %v206
  %v237 = vadd.f32 %v236, %v211
  %v238 = vadd.f32 %v237, %v214
  %v239 = vadd.f32 %v238, %v219
  %v240 = vadd.f32 %v239, %v222
  %v241 = vadd.f32 %v225, %v240
  %242 = vst [vmem:[#allocation2] sm:$0xff] %v241
  %v243 = vld [vmem:[#allocation3] sm:$0xff]
  %v244 = vmul.f32 %v163, %v163
  %v245 = vmul.f32 %v166, %v166
  %v246 = vmul.f32 %v171, %v171
  %v247 = vmul.f32 %v174, %v174
  %v248 = vmul.f32 %v179, %v179
  %v249 = vmul.f32 %v182, %v182
  %v250 = vmul.f32 %v187, %v187
  %v251 = vmul.f32 %v190, %v190
  %v252 = vmul.f32 %v195, %v195
  %v253 = vmul.f32 %v198, %v198
  %v254 = vmul.f32 %v203, %v203
  %v255 = vmul.f32 %v206, %v206
  %v256 = vmul.f32 %v211, %v211
  %v257 = vmul.f32 %v214, %v214
  %v258 = vmul.f32 %v219, %v219
  %v259 = vmul.f32 %v222, %v222
  %v260 = vadd.f32 %v244, %v245
  %v261 = vadd.f32 %v260, %v246
  %v262 = vadd.f32 %v261, %v247
  %v263 = vadd.f32 %v262, %v248
  %v264 = vadd.f32 %v263, %v249
  %v265 = vadd.f32 %v264, %v250
  %v266 = vadd.f32 %v265, %v251
  %v267 = vadd.f32 %v266, %v252
  %v268 = vadd.f32 %v267, %v253
  %v269 = vadd.f32 %v268, %v254
  %v270 = vadd.f32 %v269, %v255
  %v271 = vadd.f32 %v270, %v256
  %v272 = vadd.f32 %v271, %v257
  %v273 = vadd.f32 %v272, %v258
  %v274 = vadd.f32 %v273, %v259
  %v275 = vadd.f32 %v243, %v274
  %276 = vst [vmem:[#allocation3] sm:$0xff] %v275
  // Predicated region
  $region14: #{factorized_reduce.2} parent=0 // pred_check
    %p277 = pneg %p36
  $region15: #{factorized_reduce.2} parent=0 // pred_check_branch
    %279 = sbr.rel (%p277) target = $region17
  $region16: #{factorized_reduce.2} parent=0 // pred_region
    %v280 = vld [vmem:[#allocation2] sm:$0xff]
    %v281 = vrot.slane %v280, 4
    %v282 = vadd.f32 %v280, %v281
    %v283 = vrot.slane %v282, 2
    %v284 = vadd.f32 %v282, %v283
    %v285 = vrot.slane %v284, 1
    %v286 = vadd.f32 %v284, %v285
    %287 = vst [vmem:[%s2] sm:$0x1] %v286
    %v288 = vld [vmem:[#allocation3] sm:$0xff]
    %v289 = vrot.slane %v288, 4
    %v290 = vadd.f32 %v288, %v289
    %v291 = vrot.slane %v290, 2
    %v292 = vadd.f32 %v290, %v291
    %v293 = vrot.slane %v292, 1
    %v294 = vadd.f32 %v292, %v293
    %295 = vst [vmem:[%s3] sm:$0x1] %v294
  $region17: #{factorized_reduce.2} parent=0 // pred_fallthru
    _
  // Predicated region
  $region18: #{factorized_reduce.2} parent=0 // pred_check
    _
  $region19: #{factorized_reduce.2} parent=0 // pred_check_branch
    %297 = sbr.rel (0) target = $region21
  $region20: #{factorized_reduce.2} parent=0 // pred_region
    _
  $region21: #{factorized_reduce.2} parent=0 // pred_fallthru
    _
  // Predicated region
  $region22: #{factorized_reduce.2} parent=0 // pred_check
    _
  $region23: #{factorized_reduce.2} parent=0 // pred_check_branch
    %299 = sbr.rel (0) target = $region25
  $region24: #{factorized_reduce.2} parent=0 // pred_region
    _
  $region25: #{factorized_reduce.2} parent=0 // pred_fallthru
    _
  // Predicated region
  $region26: #{factorized_reduce.2} parent=0 // pred_check
    _
  $region27: #{factorized_reduce.2} parent=0 // pred_check_branch
    %301 = sbr.rel (0) target = $region29
  $region28: #{factorized_reduce.2} parent=0 // pred_region
    _
  $region29: #{factorized_reduce.2} parent=0 // pred_fallthru
    _
  // Predicated region
  $region30: #{factorized_reduce.2} parent=0 // pred_check
    _
  $region31: #{factorized_reduce.2} parent=0 // pred_check_branch
    %303 = sbr.rel (0) target = $region33
  $region32: #{factorized_reduce.2} parent=0 // pred_region
    _
  $region33: #{factorized_reduce.2} parent=0 // pred_fallthru
    _

// kernel: factorized_reduce.3
$region0: #{factorized_reduce.3}
  #allocation0 [shape = 'u32[]', space=smem, size = 0x4, offset = 0x4, fixed_abs, tag = 'smem constant byte address 0x4 - core index']
  #allocation1 [shape = 'u32[144,128]{1,0:T(1,128)}', space=vmem, size = 0x12000, scoped, tag = 'internal scratch']
  %s0 = inlined_call_operand.vmem [shape: bf16[128,8], index: 0, kind: input, shape index: {}]
  %s1 = inlined_call_operand.vmem [shape: bf16[8,128], index: 1, kind: input, shape index: {}]
  %s2 = inlined_call_operand.vmem [shape: f32[1,128], index: 2, kind: input, shape index: {}]
  %s3 = inlined_call_operand.vmem [shape: f32[1,128], index: 3, kind: input, shape index: {}]
  %s4 = inlined_call_operand.vmem [shape: f32[128,128], index: 4, kind: output, shape index: {}]
  %s5 = sld [smem:[#allocation0]]
  $region26: #{factorized_reduce.3} parent=0
    _
  %s7 = ssub.s32 1, %s5
  %s8 = scalar_select 0, %s7, %s5
  // Predicated region
  $region2: #{factorized_reduce.3} parent=0 // pred_check
    _
  $region3: #{factorized_reduce.3} parent=0 // pred_check_branch
    %10 = sbr.rel (0) target = $region5
  $region4: #{factorized_reduce.3} parent=0 // pred_region
    _
  $region5: #{factorized_reduce.3} parent=0 // pred_fallthru
    _
  // Predicated region
  $region6: #{factorized_reduce.3} parent=0 // pred_check
    _
  $region7: #{factorized_reduce.3} parent=0 // pred_check_branch
    %12 = sbr.rel (0) target = $region9
  $region8: #{factorized_reduce.3} parent=0 // pred_region
    _
  $region9: #{factorized_reduce.3} parent=0 // pred_fallthru
    _
  // Predicated region
  $region10: #{factorized_reduce.3} parent=0 // pred_check
    _
  $region11: #{factorized_reduce.3} parent=0 // pred_check_branch
    %14 = sbr.rel (0) target = $region13
  $region12: #{factorized_reduce.3} parent=0 // pred_region
    _
  $region13: #{factorized_reduce.3} parent=0 // pred_fallthru
    _
  // Predicated region
  $region14: #{factorized_reduce.3} parent=0 // pred_check
    _
  $region15: #{factorized_reduce.3} parent=0 // pred_check_branch
    %16 = sbr.rel (0) target = $region17
  $region16: #{factorized_reduce.3} parent=0 // pred_region
    _
  $region17: #{factorized_reduce.3} parent=0 // pred_fallthru
    _
  %v18 = vld [vmem:[%s0] sm:$0xf]
  %v19 = vld [vmem:[%s0 + $0x4] sm:$0xf]
  %v20 = vld [vmem:[%s0 + $0x8] sm:$0xf]
  %v21 = vld [vmem:[%s0 + $0xc] sm:$0xf]
  %v22 = vld [vmem:[%s0 + $0x10] sm:$0xf]
  %v23 = vld [vmem:[%s0 + $0x14] sm:$0xf]
  %v24 = vld [vmem:[%s0 + $0x18] sm:$0xf]
  %v25 = vld [vmem:[%s0 + $0x1c] sm:$0xf]
  %v26 = vld [vmem:[%s0 + $0x20] sm:$0xf]
  %v27 = vld [vmem:[%s0 + $0x24] sm:$0xf]
  %v28 = vld [vmem:[%s0 + $0x28] sm:$0xf]
  %v29 = vld [vmem:[%s0 + $0x2c] sm:$0xf]
  %v30 = vld [vmem:[%s0 + $0x30] sm:$0xf]
  %v31 = vld [vmem:[%s0 + $0x34] sm:$0xf]
  %v32 = vld [vmem:[%s0 + $0x38] sm:$0xf]
  %v33 = vld [vmem:[%s0 + $0x3c] sm:$0xf]
  %v34 = vld [vmem:[%s1] sm:$0xf]
  %v51 = vunpack.c.l.b16 %v18
  %v52 = vunpack.c.l.b16 %v19
  %v53 = vunpack.c.l.b16 %v20
  %v54 = vunpack.c.l.b16 %v21
  %v55 = vunpack.c.l.b16 %v22
  %v56 = vunpack.c.l.b16 %v23
  %v57 = vunpack.c.l.b16 %v24
  %v58 = vunpack.c.l.b16 %v25
  %v59 = vunpack.c.l.b16 %v26
  %v60 = vunpack.c.l.b16 %v27
  %v61 = vunpack.c.l.b16 %v28
  %v62 = vunpack.c.l.b16 %v29
  %v63 = vunpack.c.l.b16 %v30
  %v64 = vunpack.c.l.b16 %v31
  %v65 = vunpack.c.l.b16 %v32
  %v66 = vunpack.c.l.b16 %v33
  %v67 = vpack.c.b16 %v52, %v51
  %v68 = vpack.c.b16 %v54, %v53
  %v69 = vpack.c.b16 %v56, %v55
  %v70 = vpack.c.b16 %v58, %v57
  %v71 = vpack.c.b16 %v60, %v59
  %v72 = vpack.c.b16 %v62, %v61
  %v73 = vpack.c.b16 %v64, %v63
  %v74 = vpack.c.b16 %v66, %v65
  %vm75 = vcmask 64512
  %v77 = vsel %vm75, %v67, 0
  %v80 = vsel %vm75, %v68, 0
  %v83 = vsel %vm75, %v69, 0
  %v86 = vsel %vm75, %v70, 0
  %v89 = vsel %vm75, %v71, 0
  %v92 = vsel %vm75, %v72, 0
  %v95 = vsel %vm75, %v73, 0
  %v98 = vsel %vm75, %v74, 0
  %vm100 = vcmask 1043456
  %v102 = vsel %vm100, %v34, 0
  %104 = vmatprep.subr.bf16.mxu0 0
  %105 = vmatpush1.bf16.msra.mxu0 %v102
  %106 = vmatprep.subr.bf16.mxu0 0
  %107 = vmatpush1.bf16.msra.mxu0 0
  %108 = vmatprep.subr.bf16.mxu0 0
  %109 = vmatpush1.bf16.msra.mxu0 0
  %110 = vmatprep.subr.bf16.mxu0 0
  %111 = vmatpush1.bf16.msra.mxu0 0
  %112 = vmatprep.subr.bf16.mxu0 0
  %113 = vmatpush1.bf16.msra.mxu0 0
  %114 = vmatprep.subr.bf16.mxu0 0
  %115 = vmatpush1.bf16.msra.mxu0 0
  %116 = vmatprep.subr.bf16.mxu0 0
  %117 = vmatpush1.bf16.msra.mxu0 0
  %118 = vmatprep.subr.bf16.mxu0 0
  %119 = vmatpush1.bf16.msra.mxu0 0
  %120 = vmatprep.subr.bf16.mxu0 0
  %121 = vmatpush1.bf16.msra.mxu0 0
  %122 = vmatprep.subr.bf16.mxu0 0
  %123 = vmatpush1.bf16.msra.mxu0 0
  %124 = vmatprep.subr.bf16.mxu0 0
  %125 = vmatpush1.bf16.msra.mxu0 0
  %126 = vmatprep.subr.bf16.mxu0 0
  %127 = vmatpush1.bf16.msra.mxu0 0
  %128 = vmatprep.subr.bf16.mxu0 0
  %129 = vmatpush1.bf16.msra.mxu0 0
  %130 = vmatprep.subr.bf16.mxu0 0
  %131 = vmatpush1.bf16.msra.mxu0 0
  %132 = vmatprep.subr.bf16.mxu0 0
  %133 = vmatpush1.bf16.msra.mxu0 0
  %134 = vmatprep.subr.bf16.mxu0 0
  %135 = vmatpush1.bf16.msra.mxu0 0
  %136 = vmatprep.mubr.bf16.mxu0 0
  %137 = vmatmul.mubr.bf16.gmra.mrb[0].mxu0 %v77
  %v138 = vpop.f32.mrb[0].mxu0
  %v139 = vadd.f32 0.0, %v138
  %v140 = vpop.f32.mrb[0].mxu0
  %v141 = vpop.f32.mrb[0].mxu0
  %v142 = vadd.f32 0.0, %v141
  %v143 = vpop.f32.mrb[0].mxu0
  %144 = vmatprep.mubr.bf16.mxu0 0
  %145 = vmatmul.mubr.bf16.gmra.mrb[0].mxu0 %v80
  %v146 = vpop.f32.mrb[0].mxu0
  %v147 = vadd.f32 0.0, %v146
  %v148 = vpop.f32.mrb[0].mxu0
  %v149 = vpop.f32.mrb[0].mxu0
  %v150 = vadd.f32 0.0, %v149
  %v151 = vpop.f32.mrb[0].mxu0
  %152 = vmatprep.mubr.bf16.mxu0 0
  %153 = vmatmul.mubr.bf16.gmra.mrb[0].mxu0 %v83
  %v154 = vpop.f32.mrb[0].mxu0
  %v155 = vadd.f32 0.0, %v154
  %v156 = vpop.f32.mrb[0].mxu0
  %v157 = vpop.f32.mrb[0].mxu0
  %v158 = vadd.f32 0.0, %v157
  %v159 = vpop.f32.mrb[0].mxu0
  %160 = vmatprep.mubr.bf16.mxu0 0
  %161 = vmatmul.mubr.bf16.gmra.mrb[0].mxu0 %v86
  %v162 = vpop.f32.mrb[0].mxu0
  %v163 = vadd.f32 0.0, %v162
  %v164 = vpop.f32.mrb[0].mxu0
  %v165 = vpop.f32.mrb[0].mxu0
  %v166 = vadd.f32 0.0, %v165
  %v167 = vpop.f32.mrb[0].mxu0
  %168 = vmatprep.mubr.bf16.mxu0 0
  %169 = vmatmul.mubr.bf16.gmra.mrb[0].mxu0 %v89
  %v170 = vpop.f32.mrb[0].mxu0
  %v171 = vadd.f32 0.0, %v170
  %v172 = vpop.f32.mrb[0].mxu0
  %v173 = vpop.f32.mrb[0].mxu0
  %v174 = vadd.f32 0.0, %v173
  %v175 = vpop.f32.mrb[0].mxu0
  %176 = vmatprep.mubr.bf16.mxu0 0
  %177 = vmatmul.mubr.bf16.gmra.mrb[0].mxu0 %v92
  %v178 = vpop.f32.mrb[0].mxu0
  %v179 = vadd.f32 0.0, %v178
  %v180 = vpop.f32.mrb[0].mxu0
  %v181 = vpop.f32.mrb[0].mxu0
  %v182 = vadd.f32 0.0, %v181
  %v183 = vpop.f32.mrb[0].mxu0
  %184 = vmatprep.mubr.bf16.mxu0 0
  %185 = vmatmul.mubr.bf16.gmra.mrb[0].mxu0 %v95
  %v186 = vpop.f32.mrb[0].mxu0
  %v187 = vadd.f32 0.0, %v186
  %v188 = vpop.f32.mrb[0].mxu0
  %v189 = vpop.f32.mrb[0].mxu0
  %v190 = vadd.f32 0.0, %v189
  %v191 = vpop.f32.mrb[0].mxu0
  %192 = vmatprep.mubr.bf16.mxu0 0
  %193 = vmatmul.mubr.bf16.gmra.mrb[0].mxu0 %v98
  %v194 = vpop.f32.mrb[0].mxu0
  %v195 = vadd.f32 0.0, %v194
  %v196 = vpop.f32.mrb[0].mxu0
  %v197 = vpop.f32.mrb[0].mxu0
  %v198 = vadd.f32 0.0, %v197
  %v199 = vpop.f32.mrb[0].mxu0
  %200 = vdwg.mxu0
  %v201 = vld [vmem:[%s2] sm:$0x1]
  %v203 = vlaneseq
  %v204 = vshrl.u32 %v203, 7
  %v205 = vsub.s32 0, %v204
  %v206 = vrot.slane %v201, %v205
  %v208 = vmul.f32 %v139, %v206
  %v209 = vmul.f32 %v142, %v206
  %v210 = vmul.f32 %v147, %v206
  %v211 = vmul.f32 %v150, %v206
  %v212 = vmul.f32 %v155, %v206
  %v213 = vmul.f32 %v158, %v206
  %v214 = vmul.f32 %v163, %v206
  %v215 = vmul.f32 %v166, %v206
  %v216 = vmul.f32 %v171, %v206
  %v217 = vmul.f32 %v174, %v206
  %v218 = vmul.f32 %v179, %v206
  %v219 = vmul.f32 %v182, %v206
  %v220 = vmul.f32 %v187, %v206
  %v221 = vmul.f32 %v190, %v206
  %v222 = vmul.f32 %v195, %v206
  %v223 = vmul.f32 %v198, %v206
  %v224 = vld [vmem:[%s3] sm:$0x1]
  %v226 = vlaneseq
  %v227 = vshrl.u32 %v226, 7
  %v228 = vsub.s32 0, %v227
  %v229 = vrot.slane %v224, %v228
  %v231 = vadd.f32 %v208, %v229
  %v232 = vadd.f32 %v209, %v229
  %v233 = vadd.f32 %v210, %v229
  %v234 = vadd.f32 %v211, %v229
  %v235 = vadd.f32 %v212, %v229
  %v236 = vadd.f32 %v213, %v229
  %v237 = vadd.f32 %v214, %v229
  %v238 = vadd.f32 %v215, %v229
  %v239 = vadd.f32 %v216, %v229
  %v240 = vadd.f32 %v217, %v229
  %v241 = vadd.f32 %v218, %v229
  %v242 = vadd.f32 %v219, %v229
  %v243 = vadd.f32 %v220, %v229
  %v244 = vadd.f32 %v221, %v229
  %v245 = vadd.f32 %v222, %v229
  %v246 = vadd.f32 %v223, %v229
  %247 = vst [vmem:[%s4] sm:$0xff] %v231
  %248 = vst [vmem:[%s4 + $0x8] sm:$0xff] %v232
  %249 = vst [vmem:[%s4 + $0x10] sm:$0xff] %v233
  %250 = vst [vmem:[%s4 + $0x18] sm:$0xff] %v234
  %251 = vst [vmem:[%s4 + $0x20] sm:$0xff] %v235
  %252 = vst [vmem:[%s4 + $0x28] sm:$0xff] %v236
  %253 = vst [vmem:[%s4 + $0x30] sm:$0xff] %v237
  %254 = vst [vmem:[%s4 + $0x38] sm:$0xff] %v238
  %255 = vst [vmem:[%s4 + $0x40] sm:$0xff] %v239
  %256 = vst [vmem:[%s4 + $0x48] sm:$0xff] %v240
  %257 = vst [vmem:[%s4 + $0x50] sm:$0xff] %v241
  %258 = vst [vmem:[%s4 + $0x58] sm:$0xff] %v242
  %259 = vst [vmem:[%s4 + $0x60] sm:$0xff] %v243
  %260 = vst [vmem:[%s4 + $0x68] sm:$0xff] %v244
  %261 = vst [vmem:[%s4 + $0x70] sm:$0xff] %v245
  %262 = vst [vmem:[%s4 + $0x78] sm:$0xff] %v246
  // Predicated region
  $region18: #{factorized_reduce.3} parent=0 // pred_check
    _
  $region19: #{factorized_reduce.3} parent=0 // pred_check_branch
    %264 = sbr.rel (0) target = $region21
  $region20: #{factorized_reduce.3} parent=0 // pred_region
    _
  $region21: #{factorized_reduce.3} parent=0 // pred_fallthru
    _
  // Predicated region
  $region22: #{factorized_reduce.3} parent=0 // pred_check
    _
  $region23: #{factorized_reduce.3} parent=0 // pred_check_branch
    %266 = sbr.rel (0) target = $region25
  $region24: #{factorized_reduce.3} parent=0 // pred_region
    _
  $region25: #{factorized_reduce.3} parent=0 // pred_fallthru
    _

</llo_original>
